<compile_context>
chip_gen: v5e
topology: v5e:2x2
jax: 0.10.0
libtpu: 0.0.40
codegen_flags: <defaults>
</compile_context>

<pallas_src>
import functools

import jax
import jax.numpy as jnp
import numpy as np
from jax.experimental import pallas as pl
from jax.experimental.pallas import tpu as pltpu

ALPHA = 4

# Below this many slow-pathway bytes the fixed Pallas launch overhead beats
# any DMA win -- XLA's gather is already at roofline for such sizes.
_SMALL_INPUT_BYTES = 1 << 20  # 1 MiB

# Cap on simultaneously in-flight frame copies (bounds static unrolling and
# the DMA-semaphore array; video clips have small T so this rarely binds).
_MAX_INFLIGHT = 32


def _gather_dma_kernel(t_slow, max_inflight, idx_ref, x_hbm, o_hbm, sem):
    """HBM->HBM gather: copy frame idx[t] of x into slot t of the output.

    idx_ref : SMEM (t_slow,) int32 -- temporal gather indices
    x_hbm   : ANY/HBM (C, T, H*W)
    o_hbm   : ANY/HBM (C, t_slow, H*W)
    sem     : DMA semaphore array (min(t_slow, max_inflight),)
    """
    for start in range(0, t_slow, max_inflight):
        stop = min(start + max_inflight, t_slow)
        copies = []
        # Phase 1: issue every copy in this wave (all DMAs in flight at once).
        for t in range(start, stop):
            src = x_hbm.at[:, pl.ds(idx_ref[t], 1)]
            dst = o_hbm.at[:, pl.ds(t, 1)]
            cp = pltpu.make_async_copy(src, dst, sem.at[t - start])
            cp.start()
            copies.append(cp)
        # Phase 2: wait for completion.
        for cp in copies:
            cp.wait()


def _pack_pathway_pallas(frames, idx, t_slow):
    C, T, H, W = frames.shape
    hw = H * W
    itemsize = jnp.dtype(frames.dtype).itemsize

    # Metadata-only flatten of the spatial dims; the DMA engine just sees
    # contiguous hw-element rows either way.
    x = frames.reshape(C, T, hw)

    cost = pl.CostEstimate(
        flops=0,
        transcendentals=0,
        bytes_accessed=2 * C * t_slow * hw * itemsize,  # read + write slow bytes
    )

    n_sem = min(t_slow, _MAX_INFLIGHT)

    slow_flat = pl.pallas_call(
        functools.partial(_gather_dma_kernel, t_slow, _MAX_INFLIGHT),
        out_shape=jax.ShapeDtypeStruct((C, t_slow, hw), frames.dtype),
        in_specs=[
            pl.BlockSpec(memory_space=pltpu.SMEM),  # idx table (scalars)
            pl.BlockSpec(memory_space=pl.ANY),      # frames stay in HBM
        ],
        out_specs=pl.BlockSpec(memory_space=pl.ANY),  # slow pathway in HBM
        scratch_shapes=[pltpu.SemaphoreType.DMA((n_sem,))],
        cost_estimate=cost,
    )(idx, x)

    return slow_flat.reshape(C, t_slow, H, W)


def pack_pathway(frames: jnp.ndarray, *, force_kernel=None):
    """frames: (C, T, H, W). Returns [slow_pathway, fast_pathway]."""
    C, T, H, W = frames.shape
    t_slow = T // ALPHA

    fast_pathway = frames  # identity -- no kernel needed

    if t_slow == 0:
        # T < alpha -> empty index set (mirrors torch.index_select with an
        # empty index tensor).
        return [jnp.zeros((C, 0, H, W), frames.dtype), fast_pathway]

    # torch.linspace(0, T-1, T // alpha).long() -> truncation toward zero.
    # (A last-ULP float difference at an exact integer boundary could pick an
    #  adjacent frame -- benign for frame sampling.)
    idx_np = np.linspace(0.0, float(T - 1), t_slow).astype(np.int32)
    idx = jnp.asarray(idx_np)

    slow_bytes = C * t_slow * H * W * jnp.dtype(frames.dtype).itemsize
    use_kernel = (force_kernel if force_kernel is not None
                  else slow_bytes >= _SMALL_INPUT_BYTES)

    if use_kernel:
        slow_pathway = _pack_pathway_pallas(frames, idx, t_slow)
    else:
        # Tiny clips: the fixed custom-call launch would dominate; XLA's
        # gather is already at roofline here.
        slow_pathway = jnp.take(frames, idx, axis=1)

    return [slow_pathway, fast_pathway]


if __name__ == "__main__":
    key = jax.random.PRNGKey(0)
    # Small shapes consistent with a video clip: C=3 channels, T=8 frames,
    # 16x16 spatial.
    C, T, H, W = 3, 8, 16, 16
    frames = jax.random.normal(key, (C, T, H, W), dtype=jnp.float32)

    # Force the Pallas DMA path so the kernel itself is exercised even at
    # these tiny demo shapes.
    slow, fast = pack_pathway(frames, force_kernel=True)
    jax.block_until_ready(slow)
    jax.block_until_ready(fast)

    # Also exercise the auto-dispatch path (falls back to jnp.take here).
    slow_auto, fast_auto = pack_pathway(frames)
    jax.block_until_ready(slow_auto)

    # Reference check (plain JAX) mirroring the PyTorch semantics.
    ref_idx = jnp.asarray(
        np.linspace(0.0, float(T - 1), T // ALPHA).astype(np.int32))
    slow_ref = jnp.take(frames, ref_idx, axis=1)
    assert slow.shape == (C, T // ALPHA, H, W)
    assert fast.shape == (C, T, H, W)
    assert jnp.array_equal(slow, slow_ref)
    assert jnp.array_equal(fast, frames)
    assert jnp.array_equal(slow_auto, slow_ref)

    print("KERNEL_OK")
</pallas_src>

<mosaic_0001>
module attributes {stable_mosaic.version = 11 : i64} {
  func.func @_gather_dma_kernel(%arg0: memref<2xi32, #tpu.memory_space<smem>>, %arg1: memref<3x8x256xf32, #tpu.memory_space<any>>, %arg2: memref<3x2x256xf32, #tpu.memory_space<any>>, %arg3: memref<2x!tpu.dma_semaphore, #tpu.memory_space<semaphore_mem>>) attributes {dimension_semantics = [], scalar_prefetch = 0 : i64, scratch_operands = 1 : i64, tpu.core_type = #tpu.core_type<tc>} {
    %c0 = arith.constant 0 : index
    %0 = memref.load %arg0[%c0] : memref<2xi32, #tpu.memory_space<smem>>
    %c0_i32 = arith.constant 0 : i32
    %c0_i32_0 = arith.constant 0 : i32
    %c0_i32_1 = arith.constant 0 : i32
    %1 = tpu.memref_slice %arg1[%c0_i32_0, %0, %c0_i32_1] : memref<3x8x256xf32, #tpu.memory_space<any>> -> memref<3x1x256xf32, #tpu.memory_space<any>>
    %c0_i32_2 = arith.constant 0 : i32
    %c0_i32_3 = arith.constant 0 : i32
    %c0_i32_4 = arith.constant 0 : i32
    %2 = tpu.memref_slice %arg2[%c0_i32_2, %c0_i32_3, %c0_i32_4] : memref<3x2x256xf32, #tpu.memory_space<any>> -> memref<3x1x256xf32, #tpu.memory_space<any>>
    %3 = tpu.memref_slice %arg3[%c0_i32] : memref<2x!tpu.dma_semaphore, #tpu.memory_space<semaphore_mem>> -> memref<1x!tpu.dma_semaphore, #tpu.memory_space<semaphore_mem>>
    %4 = tpu.memref_squeeze %3 : memref<1x!tpu.dma_semaphore, #tpu.memory_space<semaphore_mem>> -> memref<!tpu.dma_semaphore, #tpu.memory_space<semaphore_mem>>
    tpu.enqueue_dma source(%1 : memref<3x1x256xf32, #tpu.memory_space<any>>) target(%2 : memref<3x1x256xf32, #tpu.memory_space<any>>) target_semaphore(%4 : memref<!tpu.dma_semaphore, #tpu.memory_space<semaphore_mem>>)
    %c1 = arith.constant 1 : index
    %5 = memref.load %arg0[%c1] : memref<2xi32, #tpu.memory_space<smem>>
    %c1_i32 = arith.constant 1 : i32
    %c0_i32_5 = arith.constant 0 : i32
    %c0_i32_6 = arith.constant 0 : i32
    %6 = tpu.memref_slice %arg1[%c0_i32_5, %5, %c0_i32_6] : memref<3x8x256xf32, #tpu.memory_space<any>> -> memref<3x1x256xf32, #tpu.memory_space<any>>
    %c0_i32_7 = arith.constant 0 : i32
    %c1_i32_8 = arith.constant 1 : i32
    %c0_i32_9 = arith.constant 0 : i32
    %7 = tpu.memref_slice %arg2[%c0_i32_7, %c1_i32_8, %c0_i32_9] : memref<3x2x256xf32, #tpu.memory_space<any>> -> memref<3x1x256xf32, #tpu.memory_space<any>>
    %8 = tpu.memref_slice %arg3[%c1_i32] : memref<2x!tpu.dma_semaphore, #tpu.memory_space<semaphore_mem>> -> memref<1x!tpu.dma_semaphore, #tpu.memory_space<semaphore_mem>>
    %9 = tpu.memref_squeeze %8 : memref<1x!tpu.dma_semaphore, #tpu.memory_space<semaphore_mem>> -> memref<!tpu.dma_semaphore, #tpu.memory_space<semaphore_mem>>
    tpu.enqueue_dma source(%6 : memref<3x1x256xf32, #tpu.memory_space<any>>) target(%7 : memref<3x1x256xf32, #tpu.memory_space<any>>) target_semaphore(%9 : memref<!tpu.dma_semaphore, #tpu.memory_space<semaphore_mem>>)
    %c0_i32_10 = arith.constant 0 : i32
    %c0_i32_11 = arith.constant 0 : i32
    %c0_i32_12 = arith.constant 0 : i32
    %10 = tpu.memref_slice %arg1[%c0_i32_11, %0, %c0_i32_12] : memref<3x8x256xf32, #tpu.memory_space<any>> -> memref<3x1x256xf32, #tpu.memory_space<any>>
    %c0_i32_13 = arith.constant 0 : i32
    %c0_i32_14 = arith.constant 0 : i32
    %c0_i32_15 = arith.constant 0 : i32
    %11 = tpu.memref_slice %arg2[%c0_i32_13, %c0_i32_14, %c0_i32_15] : memref<3x2x256xf32, #tpu.memory_space<any>> -> memref<3x1x256xf32, #tpu.memory_space<any>>
    %12 = tpu.memref_slice %arg3[%c0_i32_10] : memref<2x!tpu.dma_semaphore, #tpu.memory_space<semaphore_mem>> -> memref<1x!tpu.dma_semaphore, #tpu.memory_space<semaphore_mem>>
    %13 = tpu.memref_squeeze %12 : memref<1x!tpu.dma_semaphore, #tpu.memory_space<semaphore_mem>> -> memref<!tpu.dma_semaphore, #tpu.memory_space<semaphore_mem>>
    tpu.wait_dma2 semaphore(%13 : memref<!tpu.dma_semaphore, #tpu.memory_space<semaphore_mem>>) src(%10 : memref<3x1x256xf32, #tpu.memory_space<any>>) dst(%11 : memref<3x1x256xf32, #tpu.memory_space<any>>)
    %c1_i32_16 = arith.constant 1 : i32
    %c0_i32_17 = arith.constant 0 : i32
    %c0_i32_18 = arith.constant 0 : i32
    %14 = tpu.memref_slice %arg1[%c0_i32_17, %5, %c0_i32_18] : memref<3x8x256xf32, #tpu.memory_space<any>> -> memref<3x1x256xf32, #tpu.memory_space<any>>
    %c0_i32_19 = arith.constant 0 : i32
    %c1_i32_20 = arith.constant 1 : i32
    %c0_i32_21 = arith.constant 0 : i32
    %15 = tpu.memref_slice %arg2[%c0_i32_19, %c1_i32_20, %c0_i32_21] : memref<3x2x256xf32, #tpu.memory_space<any>> -> memref<3x1x256xf32, #tpu.memory_space<any>>
    %16 = tpu.memref_slice %arg3[%c1_i32_16] : memref<2x!tpu.dma_semaphore, #tpu.memory_space<semaphore_mem>> -> memref<1x!tpu.dma_semaphore, #tpu.memory_space<semaphore_mem>>
    %17 = tpu.memref_squeeze %16 : memref<1x!tpu.dma_semaphore, #tpu.memory_space<semaphore_mem>> -> memref<!tpu.dma_semaphore, #tpu.memory_space<semaphore_mem>>
    tpu.wait_dma2 semaphore(%17 : memref<!tpu.dma_semaphore, #tpu.memory_space<semaphore_mem>>) src(%14 : memref<3x1x256xf32, #tpu.memory_space<any>>) dst(%15 : memref<3x1x256xf32, #tpu.memory_space<any>>)
    return
  }
}

</mosaic_0001>

<llo_original>
// kernel: tpu_custom_call.1
$region0: #{tpu_custom_call.1}
  #allocation0 [shape = 'u32[]', space=smem, size = 0x4, offset = 0x4, fixed_abs, tag = 'smem constant byte address 0x4 - core index']
  #allocation1 [shape = 'u32[72,128]{1,0:T(1,128)}', space=vmem, size = 0x9000, scoped, tag = 'internal scratch']
  #allocation2 [shape = 's32[2]{0}', space=sflag, size = 0x8, scoped, tag = 'scratch operand']
  #allocation5 [shape = 's32[]', space=sflag, size = 0x4, offset = 0, fixed_abs, tag = 'sflag constant byte address 0x0 - dummy sync flag']
  #allocation7 [shape = 's32[]', space=sflag, size = 0x4, offset = 0, fixed_abs, tag = 'sflag constant byte address 0x0 - dummy sync flag']
  %s0 = inlined_call_operand.hbm [shape: s32[2], index: 0, kind: input, shape index: {}]
  %s1 = inlined_call_operand.hbm [shape: f32[3,8,256], index: 1, kind: input, shape index: {}]
  %s2 = inlined_call_operand.hbm [shape: f32[3,2,256], index: 2, kind: output, shape index: {}]
  %s3 = sld [smem:[#allocation0]]
  $region10: #{tpu_custom_call.1} parent=0
    _
  %s5 = ssub.s32 1, %s3
  %s6 = scalar_select 0, %s5, %s3
  $region1: #{tpu_custom_call.1} parent=0
    #allocation3 [shape = 'u8[512]{0}', space=smem, size = 0x200, scoped, tag = 'input window, operand 0, single buffered']
    #allocation4 [shape = 's32[1]{0}', space=sflag, size = 0x4, scoped, tag = 'scoped memory for tpu_custom_call.1']
    #allocation6 [shape = 'u32[3]{0}', space=smem, size = 0xc, scoped, tag = 'DMA stride descriptor']
    #allocation8 [shape = 'u32[3]{0}', space=smem, size = 0xc, scoped, tag = 'DMA stride descriptor']
    %7 = vsyncpa [#allocation4], 0
    // Predicated region
    $region2: #{tpu_custom_call.1} parent=1 // pred_check
      _
    $region3: #{tpu_custom_call.1} parent=1 // pred_check_branch
      %9 = sbr.rel (0) target = $region5
    $region4: #{tpu_custom_call.1} parent=1 // pred_region
      %11 = vsyncadd [#allocation4], 0
      %s13 = sshll.u32 %s0, 4
      %s14 = int_to_ptr.hbm [resolvable:$true] %s13
      %16 = dma.hbm_to_smem %s14, 16, [#allocation3], [#allocation4]
    $region5: #{tpu_custom_call.1} parent=1 // pred_fallthru
      _
    // Predicated region
    $region6: #{tpu_custom_call.1} parent=1 // pred_check
      _
    $region7: #{tpu_custom_call.1} parent=1 // pred_check_branch
      %18 = sbr.rel (0) target = $region9
    $region8: #{tpu_custom_call.1} parent=1 // pred_region
      %20 = dma.done [#allocation4], 16
    $region9: #{tpu_custom_call.1} parent=1 // pred_fallthru
      _
    %21 = sfence
    %s22 = sld [smem:[#allocation3]]
    %s23 = sshrl.u32 %s22, 3
    %s24 = sand.u32 %s22, 7
    %s25 = smul.u32 %s23, 16
    %s26 = sadd.s32 %s24, %s25
    %s27 = scalar_lea.hbm %s1, %s26
    %s29 = sshll.u32 1, 14
    %s30 = sxor.u32 4294967295, %s29
    %s32 = sshll.u32 %s27, 4
    %s33 = int_to_ptr.hbm [resolvable:$true] %s32
    %s34 = sshll.u32 %s2, 4
    %s35 = int_to_ptr.hbm [resolvable:$true] %s34
    %39 = sst [smem:[#allocation6]] 128
    %s40 = scalar_lea.smem [#allocation6], 1
    %41 = sst [smem:[%s40]] 32
    %s42 = scalar_lea.smem [#allocation6], 2
    %43 = sst [smem:[%s42]] 1
    %45 = dma.general %s33, 96, %s35, [#allocation2], [#allocation5], [#allocation6], 0, 0
    %s46 = sld [smem:[#allocation3 + $0x1]]
    %s47 = sshrl.u32 %s46, 3
    %s48 = sand.u32 %s46, 7
    %s49 = smul.u32 %s47, 16
    %s50 = sadd.s32 %s48, %s49
    %s51 = scalar_lea.hbm %s1, %s50
    %s52 = scalar_lea.hbm %s2, 1
    %s53 = scalar_lea.sflag [#allocation2], 1
    %s55 = sshll.u32 1, 14
    %s56 = sxor.u32 4294967295, %s55
    %s58 = sshll.u32 %s51, 4
    %s59 = int_to_ptr.hbm [resolvable:$true] %s58
    %s60 = sshll.u32 %s52, 4
    %s61 = int_to_ptr.hbm [resolvable:$true] %s60
    %65 = sst [smem:[#allocation8]] 128
    %s66 = scalar_lea.smem [#allocation8], 1
    %67 = sst [smem:[%s66]] 32
    %s68 = scalar_lea.smem [#allocation8], 2
    %69 = sst [smem:[%s68]] 1
    %71 = dma.general %s59, 96, %s61, %s53, [#allocation7], [#allocation8], 0, 0
    %s72 = smul.u32 3, 1
    %s73 = smul.u32 %s72, 2
    %s74 = sshll.u32 %s73, 4
    %75 = dma.done [#allocation2], %s74
    %s76 = sshll.u32 %s73, 4
    %77 = dma.done %s53, %s76
    %78 = vsyncpa [#allocation4], 1
  %79 = vsyncmov [#allocation2]
  %s80 = vpop.sfrf %79
  %p81 = scmp.eq.s32.totalorder %s80, 0
  %p82 = pneg %p81
  %84 = shalt.err (%p82)
  %s85 = scalar_lea.sflag [#allocation2], 1
  %86 = vsyncmov %s85
  %s87 = vpop.sfrf %86
  %p88 = scmp.eq.s32.totalorder %s87, 0
  %p89 = pneg %p88
  %91 = shalt.err (%p89)

</llo_original>
